<compile_context>
chip_gen: v7x
topology: tpu7x:2x2x1
jax: 0.10.0
libtpu: 0.0.40
codegen_flags: <defaults>
</compile_context>

<pallas_src>
import functools

import jax
import jax.numpy as jnp
from jax.experimental import pallas as pl
from jax.experimental.pallas import tpu as pltpu


def _round_up(x, m):
    return (x + m - 1) // m * m


def _ts3_kernel(x_ref, a_ref, out_ref, zcat_ref, *, op):
    """One batch tile.  x_ref: [tb, ip]; a_ref: [ip, 6*op] =
    [hidden1 | hidden2 | hidden3 | gate1 | gate2 | gate3].
    Single MXU matmul; f32 accumulation; f32 nonlinearities; lane-dense stores."""
    y = jnp.dot(x_ref[...], a_ref[...], preferred_element_type=jnp.float32)  # [tb, 6*op]

    h1 = jnp.tanh(y[:, 0 * op:1 * op])
    h2 = jnp.tanh(y[:, 1 * op:2 * op])
    h3 = jnp.tanh(y[:, 2 * op:3 * op])

    z = jax.nn.sigmoid(y[:, 3 * op:6 * op])                                   # [tb, 3*op]

    out_ref[...] = (z[:, 0 * op:1 * op] * h1
                    + z[:, 1 * op:2 * op] * h2
                    + z[:, 2 * op:3 * op] * h3).astype(out_ref.dtype)
    zcat_ref[...] = z.astype(zcat_ref.dtype)                                  # full-ref store


def prepare_text_shifting3_params(w1, w2, w3, wg1, wg2, wg3,
                                  compute_dtype=jnp.bfloat16):
    """Build the single fused, pre-transposed, lane-padded weight ONCE (outside hot path).

    Args (PyTorch nn.Linear layout, bias=False):
      w1: [size_out, in1], w2: [size_out, in2], w3: [size_out, in3]
      wg1/wg2/wg3: [size_out, in1+in2+in3+in4]
    """
    size_out, in1 = w1.shape
    in2 = w2.shape[1]
    in3 = w3.shape[1]
    in_total = wg1.shape[1]
    in4 = in_total - (in1 + in2 + in3)
    op = _round_up(size_out, 128)          # lane-dense output width
    ip = _round_up(in_total, 128)          # lane-dense contraction width

    def pad_n(wt):  # [rows, size_out] -> [rows, op]
        return jnp.pad(wt, ((0, 0), (0, op - size_out)))

    def zeros(rows):
        return jnp.zeros((rows, op), w1.dtype)

    # Hidden columns are block-diagonal over the modalities (rows = cat(x) features).
    hid1 = jnp.concatenate([pad_n(w1.T), zeros(in2), zeros(in3), zeros(in4)], axis=0)
    hid2 = jnp.concatenate([zeros(in1), pad_n(w2.T), zeros(in3), zeros(in4)], axis=0)
    hid3 = jnp.concatenate([zeros(in1), zeros(in2), pad_n(w3.T), zeros(in4)], axis=0)
    gates = jnp.concatenate([pad_n(wg1.T), pad_n(wg2.T), pad_n(wg3.T)], axis=1)

    a = jnp.concatenate([hid1, hid2, hid3, gates], axis=1)     # [in_total, 6*op]
    a = jnp.pad(a, ((0, ip - in_total), (0, 0)))               # zero K-padding rows

    return dict(a=a.astype(compute_dtype), size_out=size_out, op=op, ip=ip,
                in_total=in_total)


def text_shifting3_layer(xs, params, *, batch_tile=512, out_dtype=None):
    """Pallas forward of TextShifting3Layer.

    Args:
      xs: (x1 [B,in1], x2 [B,in2], x3 [B,in3], x4 [B,in4])
      params: output of prepare_text_shifting3_params
      out_dtype: dtype of the outputs (default: dtype of x1; pass bf16 to halve the
                 HBM-write-bound zcat traffic if downstream tolerates it).
    Returns:
      (out [B, size_out], zcat [B, 3*size_out])
    """
    x1, x2, x3, x4 = xs
    B = x1.shape[0]
    op = params["op"]
    ip = params["ip"]
    size_out = params["size_out"]
    in_total = params["in_total"]
    a = params["a"]
    compute_dtype = a.dtype
    out_dtype = out_dtype or x1.dtype

    # Concatenate + lane-pad K to a multiple of 128 + cast to the compute dtype in one
    # fused XLA pass (with bf16 this halves x_cat HBM traffic vs an f32 staging copy).
    pieces = [x.astype(compute_dtype) for x in (x1, x2, x3, x4)]
    if ip > in_total:
        pieces.append(jnp.zeros((B, ip - in_total), compute_dtype))
    x_cat = jnp.concatenate(pieces, axis=-1)                    # [B, ip]

    # Batch tile: big enough to amortize per-grid-step overhead, but capped so the
    # grid has >= 2 "parallel" steps whenever B allows (both v7x TensorCores get work;
    # neutral on v5e/v6e).  Multiple of 8 sublanes (16 when B permits, for bf16 packing).
    tb = min(batch_tile, _round_up(B, 8))
    if B >= 32:
        tb = min(tb, _round_up(pl.cdiv(B, 2), 16))
    grid = (pl.cdiv(B, tb),)

    itemsize_c = jnp.dtype(compute_dtype).itemsize
    itemsize_o = jnp.dtype(out_dtype).itemsize

    # Explicit VMEM budget: double-buffered x/out/zcat tiles + resident weights
    # (double-buffered by default) + f32 intermediates, with headroom.  Capped at
    # 64 MiB so the same request is valid on v7x as well as v5e/v6e.
    vmem_bytes = (2 * a.size * a.dtype.itemsize
                  + 2 * tb * ip * itemsize_c
                  + 2 * tb * op * itemsize_o
                  + 2 * tb * 3 * op * itemsize_o
                  + 2 * tb * 6 * op * 4)
    vmem_limit = min(int(vmem_bytes * 1.25) + (2 << 20), 64 << 20)

    cost = pl.CostEstimate(
        flops=2 * B * ip * 6 * op,
        transcendentals=6 * B * op,
        bytes_accessed=(x_cat.size * itemsize_c
                        + a.size * a.dtype.itemsize
                        + B * 4 * op * itemsize_o),
    )

    out_p, zcat_p = pl.pallas_call(
        functools.partial(_ts3_kernel, op=op),
        out_shape=(
            jax.ShapeDtypeStruct((B, op), out_dtype),
            jax.ShapeDtypeStruct((B, 3 * op), out_dtype),
        ),
        grid_spec=pltpu.PrefetchScalarGridSpec(
            num_scalar_prefetch=0,
            grid=grid,
            in_specs=[
                pl.BlockSpec((tb, ip), lambda i: (i, 0)),
                # Constant index_map -> fused weight stays VMEM-resident across the grid.
                pl.BlockSpec((ip, 6 * op), lambda i: (0, 0)),
            ],
            out_specs=[
                pl.BlockSpec((tb, op), lambda i: (i, 0)),
                pl.BlockSpec((tb, 3 * op), lambda i: (i, 0)),
            ],
        ),
        compiler_params=pltpu.CompilerParams(
            dimension_semantics=("parallel",),
            vmem_limit_bytes=vmem_limit,
        ),
        cost_estimate=cost,
    )(x_cat, a)

    if op == size_out:
        # Aligned fast path: no post-processing at all.
        return out_p, zcat_p
    # De-pad path: the reshape (B,3*op)->(B,3,op) is metadata-only; the slice+merge
    # fuses into a single XLA pass over zcat.  Padded lanes hold 0.5 (sigmoid(0)) for
    # zcat and 0 for out, and are dropped here.
    out = out_p[:, :size_out]
    zcat = zcat_p.reshape(B, 3, op)[:, :, :size_out].reshape(B, 3 * size_out)
    return out, zcat


def _reference(xs, w1, w2, w3, wg1, wg2, wg3):
    x1, x2, x3, _ = xs
    h1 = jnp.tanh(x1 @ w1.T)
    h2 = jnp.tanh(x2 @ w2.T)
    h3 = jnp.tanh(x3 @ w3.T)
    xc = jnp.concatenate(xs, axis=-1)
    z1 = jax.nn.sigmoid(xc @ wg1.T)
    z2 = jax.nn.sigmoid(xc @ wg2.T)
    z3 = jax.nn.sigmoid(xc @ wg3.T)
    return z1 * h1 + z2 * h2 + z3 * h3, jnp.concatenate([z1, z2, z3], axis=-1)


if __name__ == "__main__":
    base_key = jax.random.PRNGKey(0)
    case_keys = jax.random.split(base_key, 2)

    def init_linear(k, out_f, in_f):
        bound = 1.0 / (in_f ** 0.5)
        return jax.random.uniform(k, (out_f, in_f), jnp.float32, -bound, bound)

    def make_case(case_key, B, ins, size_out):
        ks = jax.random.split(case_key, 10)
        in1, in2, in3, in4 = ins
        xs = tuple(jax.random.normal(ks[i], (B, n), jnp.float32)
                   for i, n in enumerate(ins))
        in_total = sum(ins)
        w1 = init_linear(ks[4], size_out, in1)
        w2 = init_linear(ks[5], size_out, in2)
        w3 = init_linear(ks[6], size_out, in3)
        wg1 = init_linear(ks[7], size_out, in_total)
        wg2 = init_linear(ks[8], size_out, in_total)
        wg3 = init_linear(ks[9], size_out, in_total)
        return xs, (w1, w2, w3, wg1, wg2, wg3)

    # Case 1: f32 compute, size_out NOT a multiple of 128 (exercises lane padding +
    # the de-pad path), single-step grid.
    xs, ws = make_case(case_keys[0], B=8, ins=(32, 48, 16, 24), size_out=64)
    params_f32 = prepare_text_shifting3_params(*ws, compute_dtype=jnp.float32)
    out, zcat = text_shifting3_layer(xs, params_f32)
    out = jax.block_until_ready(out)
    zcat = jax.block_until_ready(zcat)
    ref_out, ref_zcat = _reference(xs, *ws)
    assert out.shape == ref_out.shape and zcat.shape == ref_zcat.shape
    assert jnp.allclose(out, ref_out, atol=1e-4, rtol=1e-4)
    assert jnp.allclose(zcat, ref_zcat, atol=1e-4, rtol=1e-4)

    # Case 2: default bf16 compute, size_out a multiple of 128 (aligned fast path),
    # multi-step parallel grid (batch split across >=2 grid steps / TensorCores).
    xs, ws = make_case(case_keys[1], B=48, ins=(32, 48, 16, 24), size_out=128)
    params_bf16 = prepare_text_shifting3_params(*ws)   # compute_dtype defaults to bf16
    out, zcat = text_shifting3_layer(xs, params_bf16)
    out = jax.block_until_ready(out)
    zcat = jax.block_until_ready(zcat)
    ref_out, ref_zcat = _reference(xs, *ws)
    assert out.shape == ref_out.shape and zcat.shape == ref_zcat.shape
    assert jnp.allclose(out, ref_out, atol=5e-2, rtol=5e-2)
    assert jnp.allclose(zcat, ref_zcat, atol=5e-2, rtol=5e-2)

    print("KERNEL_OK")
</pallas_src>

<mosaic_0001>
module attributes {stable_mosaic.version = 11 : i64} {
  func.func @_ts3_kernel(%arg0: i32, %arg1: memref<8x128xf32, #tpu.memory_space<vmem>>, %arg2: memref<128x768xf32, #tpu.memory_space<vmem>>, %arg3: memref<8x128xf32, #tpu.memory_space<vmem>>, %arg4: memref<8x384xf32, #tpu.memory_space<vmem>>) attributes {dimension_semantics = [#tpu.dimension_semantics<parallel>], iteration_bounds = array<i64: 1>, scalar_prefetch = 0 : i64, scratch_operands = 0 : i64, tpu.core_type = #tpu.core_type<tc>, window_params = [{transform_indices = @transform_0, window_bounds = array<i64: 8, 128>}, {pipeline_mode = #tpu.pipeline_mode<synchronous>, transform_indices = @transform_1, window_bounds = array<i64: 128, 768>}, {transform_indices = @transform_2, window_bounds = array<i64: 8, 128>}, {transform_indices = @transform_3, window_bounds = array<i64: 8, 384>}]} {
    %c0 = arith.constant 0 : index
    %c0_0 = arith.constant 0 : index
    %0 = vector.load %arg1[%c0, %c0_0] : memref<8x128xf32, #tpu.memory_space<vmem>>, vector<8x128xf32>
    %c0_1 = arith.constant 0 : index
    %c0_2 = arith.constant 0 : index
    %1 = vector.load %arg2[%c0_1, %c0_2] : memref<128x768xf32, #tpu.memory_space<vmem>>, vector<128x768xf32>
    %cst = arith.constant dense<0.000000e+00> : vector<8x768xf32>
    %2 = tpu.matmul %0, %1, %cst {dimension_numbers = #tpu.dot_dimension_numbers<[1], [0], [0], [1], [0, 0, 1, 1], [], []>} : vector<8x128xf32>, vector<128x768xf32>, vector<8x768xf32> -> vector<8x768xf32>
    %3 = vector.extract_strided_slice %2 {offsets = [0, 0], sizes = [8, 128], strides = [1, 1]} : vector<8x768xf32> to vector<8x128xf32>
    %4 = math.tanh %3 : vector<8x128xf32>
    %5 = vector.extract_strided_slice %2 {offsets = [0, 128], sizes = [8, 128], strides = [1, 1]} : vector<8x768xf32> to vector<8x128xf32>
    %6 = math.tanh %5 : vector<8x128xf32>
    %7 = vector.extract_strided_slice %2 {offsets = [0, 256], sizes = [8, 128], strides = [1, 1]} : vector<8x768xf32> to vector<8x128xf32>
    %8 = math.tanh %7 : vector<8x128xf32>
    %9 = vector.extract_strided_slice %2 {offsets = [0, 384], sizes = [8, 384], strides = [1, 1]} : vector<8x768xf32> to vector<8x384xf32>
    %10 = arith.negf %9 : vector<8x384xf32>
    %11 = math.exp %10 : vector<8x384xf32>
    %cst_3 = arith.constant 1.000000e+00 : f32
    %12 = vector.broadcast %cst_3 : f32 to vector<8x384xf32>
    %13 = arith.addf %12, %11 : vector<8x384xf32>
    %14 = arith.divf %12, %13 : vector<8x384xf32>
    %15 = vector.extract_strided_slice %14 {offsets = [0, 0], sizes = [8, 128], strides = [1, 1]} : vector<8x384xf32> to vector<8x128xf32>
    %16 = arith.mulf %15, %4 : vector<8x128xf32>
    %17 = vector.extract_strided_slice %14 {offsets = [0, 128], sizes = [8, 128], strides = [1, 1]} : vector<8x384xf32> to vector<8x128xf32>
    %18 = arith.mulf %17, %6 : vector<8x128xf32>
    %19 = arith.addf %16, %18 : vector<8x128xf32>
    %20 = vector.extract_strided_slice %14 {offsets = [0, 256], sizes = [8, 128], strides = [1, 1]} : vector<8x384xf32> to vector<8x128xf32>
    %21 = arith.mulf %20, %8 : vector<8x128xf32>
    %22 = arith.addf %19, %21 : vector<8x128xf32>
    %c0_4 = arith.constant 0 : index
    %c0_5 = arith.constant 0 : index
    %23 = vector.load %arg3[%c0_4, %c0_5] : memref<8x128xf32, #tpu.memory_space<vmem>>, vector<8x128xf32>
    tpu.vector_store %arg3[%c0_4, %c0_5], %22 {strides = array<i32>} : memref<8x128xf32, #tpu.memory_space<vmem>>, vector<8x128xf32>,
    %c0_6 = arith.constant 0 : index
    %c0_7 = arith.constant 0 : index
    %24 = vector.load %arg4[%c0_6, %c0_7] : memref<8x384xf32, #tpu.memory_space<vmem>>, vector<8x384xf32>
    tpu.vector_store %arg4[%c0_6, %c0_7], %14 {strides = array<i32>} : memref<8x384xf32, #tpu.memory_space<vmem>>, vector<8x384xf32>,
    return
  }
  func.func @transform_0(%arg0: i32) -> (i32, i32) {
    %c0_i32 = arith.constant 0 : i32
    %c0_i32_0 = arith.constant 0 : i32
    return %arg0, %c0_i32 : i32, i32
  }
  func.func @transform_1(%arg0: i32) -> (i32, i32) {
    %c0_i32 = arith.constant 0 : i32
    %c0_i32_0 = arith.constant 0 : i32
    %c0_i32_1 = arith.constant 0 : i32
    return %c0_i32, %c0_i32_0 : i32, i32
  }
  func.func @transform_2(%arg0: i32) -> (i32, i32) {
    %c0_i32 = arith.constant 0 : i32
    %c0_i32_0 = arith.constant 0 : i32
    return %arg0, %c0_i32 : i32, i32
  }
  func.func @transform_3(%arg0: i32) -> (i32, i32) {
    %c0_i32 = arith.constant 0 : i32
    %c0_i32_0 = arith.constant 0 : i32
    return %arg0, %c0_i32 : i32, i32
  }
}

</mosaic_0001>

<llo_original>
// kernel: tpu_custom_call.1
$region0: #{tpu_custom_call.1}
  #allocation0 [shape = 'u32[]', space=smem, size = 0x4, offset = 0x4, fixed_abs, tag = 'smem constant byte address 0x4 - core index']
  #allocation1 [shape = 'u32[144,128]{1,0:T(1,128)}', space=vmem, size = 0x12000, scoped, tag = 'internal scratch']
  %s0 = inlined_call_operand.hbm [shape: f32[8,128], index: 0, kind: input, shape index: {}]
  %s1 = inlined_call_operand.hbm [shape: f32[128,768], index: 1, kind: input, shape index: {}]
  %s2 = inlined_call_operand.hbm [shape: f32[8,128], index: 2, kind: output, shape index: {0}]
  %s3 = inlined_call_operand.hbm [shape: f32[8,384], index: 3, kind: output, shape index: {1}]
  %4 = xla_tuple %s2, %s3
  %s5 = sld [smem:[#allocation0]]
  $region34: #{tpu_custom_call.1} parent=0
    _
  %s7 = ssub.s32 1, %s5
  %s8 = scalar_select 0, %s7, %s5
  $region1: #{tpu_custom_call.1} parent=0
    #allocation2 [shape = 'u8[4096]{0}', space=vmem, size = 0x1000, scoped, tag = 'input window, operand 0, single buffered']
    #allocation3 [shape = 's32[1]{0}', space=sflag, size = 0x4, scoped, tag = 'scoped memory for tpu_custom_call.1']
    #allocation4 [shape = 's32[1]{0}', space=sflag, size = 0x4, scoped, tag = 'scoped memory for tpu_custom_call.1']
    #allocation5 [shape = 'u8[393216]{0}', space=vmem, size = 0x60000, scoped, tag = 'input window, operand 1, single buffered']
    #allocation6 [shape = 's32[1]{0}', space=sflag, size = 0x4, scoped, tag = 'scoped memory for tpu_custom_call.1']
    #allocation7 [shape = 'u8[4096]{0}', space=vmem, size = 0x1000, scoped, tag = 'output window, operand 0, single buffered']
    #allocation8 [shape = 'u8[12288]{0}', space=vmem, size = 0x3000, scoped, tag = 'output window, operand 1, single buffered']
    #allocation9 [shape = 's32[1]{0}', space=sflag, size = 0x4, scoped, tag = 'scoped memory for tpu_custom_call.1']
    %9 = vsyncpa [#allocation3], 0
    %10 = vsyncpa [#allocation6], 0
    %11 = vsyncpa [#allocation4], 0
    %12 = vsyncpa [#allocation9], 0
    // Predicated region
    $region2: #{tpu_custom_call.1} parent=1 // pred_check
      _
    $region3: #{tpu_custom_call.1} parent=1 // pred_check_branch
      %14 = sbr.rel (0) target = $region5
    $region4: #{tpu_custom_call.1} parent=1 // pred_region
      %s16 = ssub.s32 128, 128
      %17 = vsyncadd [#allocation3], %s16
      %s19 = sshll.u32 [#allocation2], 4
      %s20 = int_to_ptr.vmem [resolvable:$true] %s19
      %22 = dma.hbm_to_vmem [thread:$0]  %s0, 128, %s20, [#allocation3]
    $region5: #{tpu_custom_call.1} parent=1 // pred_fallthru
      _
    // Predicated region
    $region6: #{tpu_custom_call.1} parent=1 // pred_check
      _
    $region7: #{tpu_custom_call.1} parent=1 // pred_check_branch
      %24 = sbr.rel (0) target = $region9
    $region8: #{tpu_custom_call.1} parent=1 // pred_region
      %s26 = ssub.s32 12288, 12288
      %27 = vsyncadd [#allocation6], %s26
      %s28 = sshll.u32 [#allocation5], 4
      %s29 = int_to_ptr.vmem [resolvable:$true] %s28
      %34 = dma.hbm_to_vmem [thread:$0]  %s1, 12288, %s29, [#allocation6], 768, 768, 48
    $region9: #{tpu_custom_call.1} parent=1 // pred_fallthru
      _
    // Predicated region
    $region10: #{tpu_custom_call.1} parent=1 // pred_check
      _
    $region11: #{tpu_custom_call.1} parent=1 // pred_check_branch
      %36 = sbr.rel (0) target = $region13
    $region12: #{tpu_custom_call.1} parent=1 // pred_region
      %37 = dma.done [#allocation3], 128
    $region13: #{tpu_custom_call.1} parent=1 // pred_fallthru
      _
    // Predicated region
    $region14: #{tpu_custom_call.1} parent=1 // pred_check
      _
    $region15: #{tpu_custom_call.1} parent=1 // pred_check_branch
      %39 = sbr.rel (0) target = $region17
    $region16: #{tpu_custom_call.1} parent=1 // pred_region
      %40 = dma.done [#allocation6], 12288
    $region17: #{tpu_custom_call.1} parent=1 // pred_fallthru
      _
    %v41 = vld [vmem:[#allocation2] sm:$0xff]
    %v42 = vld [vmem:[#allocation5] sm:$0xff]
    %v43 = vld [vmem:[#allocation5 + $0x8] sm:$0xff]
    %v44 = vld [vmem:[#allocation5 + $0x10] sm:$0xff]
    %v45 = vld [vmem:[#allocation5 + $0x18] sm:$0xff]
    %v46 = vld [vmem:[#allocation5 + $0x20] sm:$0xff]
    %v47 = vld [vmem:[#allocation5 + $0x28] sm:$0xff]
    %v48 = vld [vmem:[#allocation5 + $0x30] sm:$0xff]
    %v49 = vld [vmem:[#allocation5 + $0x38] sm:$0xff]
    %v50 = vld [vmem:[#allocation5 + $0x40] sm:$0xff]
    %v51 = vld [vmem:[#allocation5 + $0x48] sm:$0xff]
    %v52 = vld [vmem:[#allocation5 + $0x50] sm:$0xff]
    %v53 = vld [vmem:[#allocation5 + $0x58] sm:$0xff]
    %v54 = vld [vmem:[#allocation5 + $0x60] sm:$0xff]
    %v55 = vld [vmem:[#allocation5 + $0x68] sm:$0xff]
    %v56 = vld [vmem:[#allocation5 + $0x70] sm:$0xff]
    %v57 = vld [vmem:[#allocation5 + $0x78] sm:$0xff]
    %v58 = vld [vmem:[#allocation5 + $0x80] sm:$0xff]
    %v59 = vld [vmem:[#allocation5 + $0x88] sm:$0xff]
    %v60 = vld [vmem:[#allocation5 + $0x90] sm:$0xff]
    %v61 = vld [vmem:[#allocation5 + $0x98] sm:$0xff]
    %v62 = vld [vmem:[#allocation5 + $0xa0] sm:$0xff]
    %v63 = vld [vmem:[#allocation5 + $0xa8] sm:$0xff]
    %v64 = vld [vmem:[#allocation5 + $0xb0] sm:$0xff]
    %v65 = vld [vmem:[#allocation5 + $0xb8] sm:$0xff]
    %v66 = vld [vmem:[#allocation5 + $0xc0] sm:$0xff]
    %v67 = vld [vmem:[#allocation5 + $0xc8] sm:$0xff]
    %v68 = vld [vmem:[#allocation5 + $0xd0] sm:$0xff]
    %v69 = vld [vmem:[#allocation5 + $0xd8] sm:$0xff]
    %v70 = vld [vmem:[#allocation5 + $0xe0] sm:$0xff]
    %v71 = vld [vmem:[#allocation5 + $0xe8] sm:$0xff]
    %v72 = vld [vmem:[#allocation5 + $0xf0] sm:$0xff]
    %v73 = vld [vmem:[#allocation5 + $0xf8] sm:$0xff]
    %v74 = vld [vmem:[#allocation5 + $0x100] sm:$0xff]
    %v75 = vld [vmem:[#allocation5 + $0x108] sm:$0xff]
    %v76 = vld [vmem:[#allocation5 + $0x110] sm:$0xff]
    %v77 = vld [vmem:[#allocation5 + $0x118] sm:$0xff]
    %v78 = vld [vmem:[#allocation5 + $0x120] sm:$0xff]
    %v79 = vld [vmem:[#allocation5 + $0x128] sm:$0xff]
    %v80 = vld [vmem:[#allocation5 + $0x130] sm:$0xff]
    %v81 = vld [vmem:[#allocation5 + $0x138] sm:$0xff]
    %v82 = vld [vmem:[#allocation5 + $0x140] sm:$0xff]
    %v83 = vld [vmem:[#allocation5 + $0x148] sm:$0xff]
    %v84 = vld [vmem:[#allocation5 + $0x150] sm:$0xff]
    %v85 = vld [vmem:[#allocation5 + $0x158] sm:$0xff]
    %v86 = vld [vmem:[#allocation5 + $0x160] sm:$0xff]
    %v87 = vld [vmem:[#allocation5 + $0x168] sm:$0xff]
    %v88 = vld [vmem:[#allocation5 + $0x170] sm:$0xff]
    %v89 = vld [vmem:[#allocation5 + $0x178] sm:$0xff]
    %v90 = vld [vmem:[#allocation5 + $0x180] sm:$0xff]
    %v91 = vld [vmem:[#allocation5 + $0x188] sm:$0xff]
    %v92 = vld [vmem:[#allocation5 + $0x190] sm:$0xff]
    %v93 = vld [vmem:[#allocation5 + $0x198] sm:$0xff]
    %v94 = vld [vmem:[#allocation5 + $0x1a0] sm:$0xff]
    %v95 = vld [vmem:[#allocation5 + $0x1a8] sm:$0xff]
    %v96 = vld [vmem:[#allocation5 + $0x1b0] sm:$0xff]
    %v97 = vld [vmem:[#allocation5 + $0x1b8] sm:$0xff]
    %v98 = vld [vmem:[#allocation5 + $0x1c0] sm:$0xff]
    %v99 = vld [vmem:[#allocation5 + $0x1c8] sm:$0xff]
    %v100 = vld [vmem:[#allocation5 + $0x1d0] sm:$0xff]
    %v101 = vld [vmem:[#allocation5 + $0x1d8] sm:$0xff]
    %v102 = vld [vmem:[#allocation5 + $0x1e0] sm:$0xff]
    %v103 = vld [vmem:[#allocation5 + $0x1e8] sm:$0xff]
    %v104 = vld [vmem:[#allocation5 + $0x1f0] sm:$0xff]
    %v105 = vld [vmem:[#allocation5 + $0x1f8] sm:$0xff]
    %v106 = vld [vmem:[#allocation5 + $0x200] sm:$0xff]
    %v107 = vld [vmem:[#allocation5 + $0x208] sm:$0xff]
    %v108 = vld [vmem:[#allocation5 + $0x210] sm:$0xff]
    %v109 = vld [vmem:[#allocation5 + $0x218] sm:$0xff]
    %v110 = vld [vmem:[#allocation5 + $0x220] sm:$0xff]
    %v111 = vld [vmem:[#allocation5 + $0x228] sm:$0xff]
    %v112 = vld [vmem:[#allocation5 + $0x230] sm:$0xff]
    %v113 = vld [vmem:[#allocation5 + $0x238] sm:$0xff]
    %v114 = vld [vmem:[#allocation5 + $0x240] sm:$0xff]
    %v115 = vld [vmem:[#allocation5 + $0x248] sm:$0xff]
    %v116 = vld [vmem:[#allocation5 + $0x250] sm:$0xff]
    %v117 = vld [vmem:[#allocation5 + $0x258] sm:$0xff]
    %v118 = vld [vmem:[#allocation5 + $0x260] sm:$0xff]
    %v119 = vld [vmem:[#allocation5 + $0x268] sm:$0xff]
    %v120 = vld [vmem:[#allocation5 + $0x270] sm:$0xff]
    %v121 = vld [vmem:[#allocation5 + $0x278] sm:$0xff]
    %v122 = vld [vmem:[#allocation5 + $0x280] sm:$0xff]
    %v123 = vld [vmem:[#allocation5 + $0x288] sm:$0xff]
    %v124 = vld [vmem:[#allocation5 + $0x290] sm:$0xff]
    %v125 = vld [vmem:[#allocation5 + $0x298] sm:$0xff]
    %v126 = vld [vmem:[#allocation5 + $0x2a0] sm:$0xff]
    %v127 = vld [vmem:[#allocation5 + $0x2a8] sm:$0xff]
    %v128 = vld [vmem:[#allocation5 + $0x2b0] sm:$0xff]
    %v129 = vld [vmem:[#allocation5 + $0x2b8] sm:$0xff]
    %v130 = vld [vmem:[#allocation5 + $0x2c0] sm:$0xff]
    %v131 = vld [vmem:[#allocation5 + $0x2c8] sm:$0xff]
    %v132 = vld [vmem:[#allocation5 + $0x2d0] sm:$0xff]
    %v133 = vld [vmem:[#allocation5 + $0x2d8] sm:$0xff]
    %v134 = vld [vmem:[#allocation5 + $0x2e0] sm:$0xff]
    %v135 = vld [vmem:[#allocation5 + $0x2e8] sm:$0xff]
    %v136 = vld [vmem:[#allocation5 + $0x2f0] sm:$0xff]
    %v137 = vld [vmem:[#allocation5 + $0x2f8] sm:$0xff]
    %138 = vmatprep.subr.mxu0 %v43
    %139 = vmatpush1.msra.mxu0 %v42
    %140 = vmatprep.subr.mxu0 %v49
    %141 = vmatpush1.msra.mxu0 %v48
    %142 = vmatprep.subr.mxu0 %v55
    %143 = vmatpush1.msra.mxu0 %v54
    %144 = vmatprep.subr.mxu0 %v61
    %145 = vmatpush1.msra.mxu0 %v60
    %146 = vmatprep.subr.mxu0 %v67
    %147 = vmatpush1.msra.mxu0 %v66
    %148 = vmatprep.subr.mxu0 %v73
    %149 = vmatpush1.msra.mxu0 %v72
    %150 = vmatprep.subr.mxu0 %v79
    %151 = vmatpush1.msra.mxu0 %v78
    %152 = vmatprep.subr.mxu0 %v85
    %153 = vmatpush1.msra.mxu0 %v84
    %154 = vmatprep.subr.mxu0 %v91
    %155 = vmatpush1.msra.mxu0 %v90
    %156 = vmatprep.subr.mxu0 %v97
    %157 = vmatpush1.msra.mxu0 %v96
    %158 = vmatprep.subr.mxu0 %v103
    %159 = vmatpush1.msra.mxu0 %v102
    %160 = vmatprep.subr.mxu0 %v109
    %161 = vmatpush1.msra.mxu0 %v108
    %162 = vmatprep.subr.mxu0 %v115
    %163 = vmatpush1.msra.mxu0 %v114
    %164 = vmatprep.subr.mxu0 %v121
    %165 = vmatpush1.msra.mxu0 %v120
    %166 = vmatprep.subr.mxu0 %v127
    %167 = vmatpush1.msra.mxu0 %v126
    %168 = vmatprep.subr.mxu0 %v133
    %169 = vmatpush1.msra.mxu0 %v132
    %170 = vmatprep.subr.mxu0 0.0
    %171 = vmatpush1.msra.mxu0 0.0
    %172 = vmatprep.subr.mxu0 0.0
    %173 = vmatpush1.msra.mxu0 0.0
    %174 = vmatprep.subr.mxu0 0.0
    %175 = vmatpush1.msra.mxu0 0.0
    %176 = vmatprep.subr.mxu0 0.0
    %177 = vmatpush1.msra.mxu0 0.0
    %178 = vmatprep.subr.mxu0 0.0
    %179 = vmatpush1.msra.mxu0 0.0
    %180 = vmatprep.subr.mxu0 0.0
    %181 = vmatpush1.msra.mxu0 0.0
    %182 = vmatprep.subr.mxu0 0.0
    %183 = vmatpush1.msra.mxu0 0.0
    %184 = vmatprep.subr.mxu0 0.0
    %185 = vmatpush1.msra.mxu0 0.0
    %186 = vmatprep.subr.mxu0 0.0
    %187 = vmatpush1.msra.mxu0 0.0
    %188 = vmatprep.subr.mxu0 0.0
    %189 = vmatpush1.msra.mxu0 0.0
    %190 = vmatprep.subr.mxu0 0.0
    %191 = vmatpush1.msra.mxu0 0.0
    %192 = vmatprep.subr.mxu0 0.0
    %193 = vmatpush1.msra.mxu0 0.0
    %194 = vmatprep.subr.mxu0 0.0
    %195 = vmatpush1.msra.mxu0 0.0
    %196 = vmatprep.subr.mxu0 0.0
    %197 = vmatpush1.msra.mxu0 0.0
    %198 = vmatprep.subr.mxu0 0.0
    %199 = vmatpush1.msra.mxu0 0.0
    %200 = vmatprep.subr.mxu0 0.0
    %201 = vmatpush1.msra.mxu0 0.0
    %202 = vmatprep.mubr.f32.mxu0 0.0
    %203 = vmatmul.mubr.f32.gmra.mrb[0].mxu0 %v41
    %v204 = vpop.f32.mrb[0].mxu0
    %v205 = vadd.f32 0.0, %v204
    %v206 = vpop.f32.mrb[0].mxu0
    %v207 = vadd.f32 0.0, %v206
    %208 = vdwg.mxu0
    %209 = vmatprep.subr.mxu0 %v45
    %210 = vmatpush1.msra.mxu0 %v44
    %211 = vmatprep.subr.mxu0 %v51
    %212 = vmatpush1.msra.mxu0 %v50
    %213 = vmatprep.subr.mxu0 %v57
    %214 = vmatpush1.msra.mxu0 %v56
    %215 = vmatprep.subr.mxu0 %v63
    %216 = vmatpush1.msra.mxu0 %v62
    %217 = vmatprep.subr.mxu0 %v69
    %218 = vmatpush1.msra.mxu0 %v68
    %219 = vmatprep.subr.mxu0 %v75
    %220 = vmatpush1.msra.mxu0 %v74
    %221 = vmatprep.subr.mxu0 %v81
    %222 = vmatpush1.msra.mxu0 %v80
    %223 = vmatprep.subr.mxu0 %v87
    %224 = vmatpush1.msra.mxu0 %v86
    %225 = vmatprep.subr.mxu0 %v93
    %226 = vmatpush1.msra.mxu0 %v92
    %227 = vmatprep.subr.mxu0 %v99
    %228 = vmatpush1.msra.mxu0 %v98
    %229 = vmatprep.subr.mxu0 %v105
    %230 = vmatpush1.msra.mxu0 %v104
    %231 = vmatprep.subr.mxu0 %v111
    %232 = vmatpush1.msra.mxu0 %v110
    %233 = vmatprep.subr.mxu0 %v117
    %234 = vmatpush1.msra.mxu0 %v116
    %235 = vmatprep.subr.mxu0 %v123
    %236 = vmatpush1.msra.mxu0 %v122
    %237 = vmatprep.subr.mxu0 %v129
    %238 = vmatpush1.msra.mxu0 %v128
    %239 = vmatprep.subr.mxu0 %v135
    %240 = vmatpush1.msra.mxu0 %v134
    %241 = vmatprep.subr.mxu0 0.0
    %242 = vmatpush1.msra.mxu0 0.0
    %243 = vmatprep.subr.mxu0 0.0
    %244 = vmatpush1.msra.mxu0 0.0
    %245 = vmatprep.subr.mxu0 0.0
    %246 = vmatpush1.msra.mxu0 0.0
    %247 = vmatprep.subr.mxu0 0.0
    %248 = vmatpush1.msra.mxu0 0.0
    %249 = vmatprep.subr.mxu0 0.0
    %250 = vmatpush1.msra.mxu0 0.0
    %251 = vmatprep.subr.mxu0 0.0
    %252 = vmatpush1.msra.mxu0 0.0
    %253 = vmatprep.subr.mxu0 0.0
    %254 = vmatpush1.msra.mxu0 0.0
    %255 = vmatprep.subr.mxu0 0.0
    %256 = vmatpush1.msra.mxu0 0.0
    %257 = vmatprep.subr.mxu0 0.0
    %258 = vmatpush1.msra.mxu0 0.0
    %259 = vmatprep.subr.mxu0 0.0
    %260 = vmatpush1.msra.mxu0 0.0
    %261 = vmatprep.subr.mxu0 0.0
    %262 = vmatpush1.msra.mxu0 0.0
    %263 = vmatprep.subr.mxu0 0.0
    %264 = vmatpush1.msra.mxu0 0.0
    %265 = vmatprep.subr.mxu0 0.0
    %266 = vmatpush1.msra.mxu0 0.0
    %267 = vmatprep.subr.mxu0 0.0
    %268 = vmatpush1.msra.mxu0 0.0
    %269 = vmatprep.subr.mxu0 0.0
    %270 = vmatpush1.msra.mxu0 0.0
    %271 = vmatprep.subr.mxu0 0.0
    %272 = vmatpush1.msra.mxu0 0.0
    %273 = vmatprep.mubr.f32.mxu0 0.0
    %274 = vmatmul.mubr.f32.gmra.mrb[0].mxu0 %v41
    %v275 = vpop.f32.mrb[0].mxu0
    %v276 = vadd.f32 0.0, %v275
    %v277 = vpop.f32.mrb[0].mxu0
    %v278 = vadd.f32 0.0, %v277
    %279 = vdwg.mxu0
    %280 = vmatprep.subr.mxu0 %v47
    %281 = vmatpush1.msra.mxu0 %v46
    %282 = vmatprep.subr.mxu0 %v53
    %283 = vmatpush1.msra.mxu0 %v52
    %284 = vmatprep.subr.mxu0 %v59
    %285 = vmatpush1.msra.mxu0 %v58
    %286 = vmatprep.subr.mxu0 %v65
    %287 = vmatpush1.msra.mxu0 %v64
    %288 = vmatprep.subr.mxu0 %v71
    %289 = vmatpush1.msra.mxu0 %v70
    %290 = vmatprep.subr.mxu0 %v77
    %291 = vmatpush1.msra.mxu0 %v76
    %292 = vmatprep.subr.mxu0 %v83
    %293 = vmatpush1.msra.mxu0 %v82
    %294 = vmatprep.subr.mxu0 %v89
    %295 = vmatpush1.msra.mxu0 %v88
    %296 = vmatprep.subr.mxu0 %v95
    %297 = vmatpush1.msra.mxu0 %v94
    %298 = vmatprep.subr.mxu0 %v101
    %299 = vmatpush1.msra.mxu0 %v100
    %300 = vmatprep.subr.mxu0 %v107
    %301 = vmatpush1.msra.mxu0 %v106
    %302 = vmatprep.subr.mxu0 %v113
    %303 = vmatpush1.msra.mxu0 %v112
    %304 = vmatprep.subr.mxu0 %v119
    %305 = vmatpush1.msra.mxu0 %v118
    %306 = vmatprep.subr.mxu0 %v125
    %307 = vmatpush1.msra.mxu0 %v124
    %308 = vmatprep.subr.mxu0 %v131
    %309 = vmatpush1.msra.mxu0 %v130
    %310 = vmatprep.subr.mxu0 %v137
    %311 = vmatpush1.msra.mxu0 %v136
    %312 = vmatprep.subr.mxu0 0.0
    %313 = vmatpush1.msra.mxu0 0.0
    %314 = vmatprep.subr.mxu0 0.0
    %315 = vmatpush1.msra.mxu0 0.0
    %316 = vmatprep.subr.mxu0 0.0
    %317 = vmatpush1.msra.mxu0 0.0
    %318 = vmatprep.subr.mxu0 0.0
    %319 = vmatpush1.msra.mxu0 0.0
    %320 = vmatprep.subr.mxu0 0.0
    %321 = vmatpush1.msra.mxu0 0.0
    %322 = vmatprep.subr.mxu0 0.0
    %323 = vmatpush1.msra.mxu0 0.0
    %324 = vmatprep.subr.mxu0 0.0
    %325 = vmatpush1.msra.mxu0 0.0
    %326 = vmatprep.subr.mxu0 0.0
    %327 = vmatpush1.msra.mxu0 0.0
    %328 = vmatprep.subr.mxu0 0.0
    %329 = vmatpush1.msra.mxu0 0.0
    %330 = vmatprep.subr.mxu0 0.0
    %331 = vmatpush1.msra.mxu0 0.0
    %332 = vmatprep.subr.mxu0 0.0
    %333 = vmatpush1.msra.mxu0 0.0
    %334 = vmatprep.subr.mxu0 0.0
    %335 = vmatpush1.msra.mxu0 0.0
    %336 = vmatprep.subr.mxu0 0.0
    %337 = vmatpush1.msra.mxu0 0.0
    %338 = vmatprep.subr.mxu0 0.0
    %339 = vmatpush1.msra.mxu0 0.0
    %340 = vmatprep.subr.mxu0 0.0
    %341 = vmatpush1.msra.mxu0 0.0
    %342 = vmatprep.subr.mxu0 0.0
    %343 = vmatpush1.msra.mxu0 0.0
    %344 = vmatprep.mubr.f32.mxu0 0.0
    %345 = vmatmul.mubr.f32.gmra.mrb[0].mxu0 %v41
    %v346 = vpop.f32.mrb[0].mxu0
    %v347 = vadd.f32 0.0, %v346
    %v348 = vpop.f32.mrb[0].mxu0
    %v349 = vadd.f32 0.0, %v348
    %350 = vdwg.mxu0
    %v351 = vtanh.pop %v205
    %v352 = vtanh.pop %v207
    %v353 = vtanh.pop %v276
    %v354 = vxor.u32 %v278, 2147483648
    %v355 = vxor.u32 %v347, 2147483648
    %v356 = vxor.u32 %v349, 2147483648
    %v357 = vmul.f32 %v354, 1.442695
    %v358 = vpow.pop %v357
    %v359 = vmul.f32 %v355, 1.442695
    %v360 = vpow.pop %v359
    %v361 = vmul.f32 %v356, 1.442695
    %v362 = vpow.pop %v361
    %v363 = vadd.f32 %v358, 1.0
    %v364 = vadd.f32 %v360, 1.0
    %v365 = vadd.f32 %v362, 1.0
    %v366 = vrcp.pop %v363
    %v367 = vmul.f32 1.0, %v366
    %v368 = vrcp.pop %v364
    %v369 = vmul.f32 1.0, %v368
    %v370 = vrcp.pop %v365
    %v371 = vmul.f32 1.0, %v370
    %v372 = vmul.f32 %v367, %v351
    %v373 = vmul.f32 %v369, %v352
    %v374 = vadd.f32 %v372, %v373
    %v375 = vmul.f32 %v371, %v353
    %v376 = vadd.f32 %v374, %v375
    %377 = vst [vmem:[#allocation7] sm:$0xff] %v376
    %378 = vst [vmem:[#allocation8] sm:$0xff] %v367
    %379 = vst [vmem:[#allocation8 + $0x8] sm:$0xff] %v369
    %380 = vst [vmem:[#allocation8 + $0x10] sm:$0xff] %v371
    // Predicated region
    $region18: #{tpu_custom_call.1} parent=1 // pred_check
      _
    $region19: #{tpu_custom_call.1} parent=1 // pred_check_branch
      %382 = sbr.rel (0) target = $region21
    $region20: #{tpu_custom_call.1} parent=1 // pred_region
      %s384 = ssub.s32 128, 128
      %385 = vsyncadd [#allocation4], %s384
      %s387 = sshll.u32 [#allocation7], 4
      %s388 = int_to_ptr.vmem [resolvable:$true] %s387
      %390 = dma.vmem_to_hbm [thread:$0]  %s388, 128, %s2, [#allocation4]
    $region21: #{tpu_custom_call.1} parent=1 // pred_fallthru
      _
    // Predicated region
    $region22: #{tpu_custom_call.1} parent=1 // pred_check
      _
    $region23: #{tpu_custom_call.1} parent=1 // pred_check_branch
      %392 = sbr.rel (0) target = $region25
    $region24: #{tpu_custom_call.1} parent=1 // pred_region
      %s394 = ssub.s32 384, 384
      %395 = vsyncadd [#allocation9], %s394
      %s397 = sshll.u32 [#allocation8], 4
      %s398 = int_to_ptr.vmem [resolvable:$true] %s397
      %400 = dma.vmem_to_hbm [thread:$0]  %s398, 384, %s3, [#allocation9]
    $region25: #{tpu_custom_call.1} parent=1 // pred_fallthru
      _
    // Predicated region
    $region26: #{tpu_custom_call.1} parent=1 // pred_check
      _
    $region27: #{tpu_custom_call.1} parent=1 // pred_check_branch
      %402 = sbr.rel (0) target = $region29
    $region28: #{tpu_custom_call.1} parent=1 // pred_region
      %403 = dma.done [#allocation4], 128
    $region29: #{tpu_custom_call.1} parent=1 // pred_fallthru
      _
    // Predicated region
    $region30: #{tpu_custom_call.1} parent=1 // pred_check
      _
    $region31: #{tpu_custom_call.1} parent=1 // pred_check_branch
      %405 = sbr.rel (0) target = $region33
    $region32: #{tpu_custom_call.1} parent=1 // pred_region
      %406 = dma.done [#allocation9], 384
    $region33: #{tpu_custom_call.1} parent=1 // pred_fallthru
      _
    %407 = vsyncpa [#allocation3], 1
    %408 = vsyncpa [#allocation6], 1
    %409 = vsyncpa [#allocation4], 1
    %410 = vsyncpa [#allocation9], 1

</llo_original>
